<compile_context>
chip_gen: v7x
topology: tpu7x:2x2x1
jax: 0.10.0
libtpu: 0.0.40
codegen_flags: <defaults>
</compile_context>

<pallas_src>
import functools

import jax
import jax.numpy as jnp
from jax import lax
from jax.experimental import pallas as pl
from jax.experimental.pallas import tpu as pltpu


# ---------------------------------------------------------------------------
# Structure-mask synthesis (boolean, from global row/col indices; no HBM mask)
# ---------------------------------------------------------------------------
def _mask_pair(mode, grow, gcol, n, *, with_valid):
    """Boolean (M[i,j], M[j,i]) evaluated at global coordinates i=grow, j=gcol."""
    if mode == "fully":
        m = grow != gcol
        mt = m
    elif mode == "ring":
        d = gcol - grow                         # |i-j| == 1 (mod N), no integer mod
        m = (d == 1) | (d == -1) | (d == n - 1) | (d == -(n - 1))
        mt = m
    elif mode == "chain":                       # asymmetric mask: only j == i + 1
        m = gcol == grow + 1
        mt = grow == gcol + 1
    elif mode == "star":
        m = ((grow == 0) & (gcol > 0)) | ((gcol == 0) & (grow > 0))
        mt = m
    else:                                       # unknown mode -> zero mask (torch fallback)
        m = jnp.zeros(grow.shape, jnp.bool_)
        mt = m
    if with_valid:                              # exclude zero-padded rows/cols
        valid = (grow < n) & (gcol < n)
        m = m & valid
        mt = mt & valid
    return m, mt


# ---------------------------------------------------------------------------
# Fast path: N small enough for a single VMEM tile -> one fused kernel
# ---------------------------------------------------------------------------
def _fused_kernel(mode, n, w_ref, out_ref):
    w = w_ref[...].astype(jnp.float32)          # cast in-kernel (native dtype stream)
    s = jax.nn.sigmoid(w)                       # EUP
    row = lax.broadcasted_iota(jnp.int32, w.shape, 0)
    col = lax.broadcasted_iota(jnp.int32, w.shape, 1)
    if mode == "fully":
        a = 0.5 * (s + s.T)                     # off-diag mask is all-ones; diag fixed below
    else:
        m, mt = _mask_pair(mode, row, col, n, with_valid=False)
        a = 0.5 * (jnp.where(m, s, 0.0) + jnp.where(mt, s.T, 0.0))
    a_hat = jnp.where(row == col, 1.0, a)       # fill_diagonal_(0); A_hat = A + I
    # diag(A_hat) == 1  =>  every degree >= 1  =>  no inf->0 guard needed.
    # A_hat is symmetric: one sublane (axis-0) reduction + one thin transpose
    # replaces a second full N^2 cross-lane reduction.
    inv_c = lax.rsqrt(jnp.sum(a_hat, axis=0, keepdims=True))   # (1, N)
    inv_r = inv_c.T                                            # (N, 1) thin relayout
    out_ref[...] = inv_r * a_hat * inv_c


# ---------------------------------------------------------------------------
# Tiled path, pass 1: single-stream degree computation over row panels
#   deg_j = 1 + 0.5 * (colsum_j(B) + rowsum_j(B)),   B = where(mask, sigmoid(W), 0)
# ---------------------------------------------------------------------------
def _degree_kernel(mode, n, w_ref, colsum_ref, rowsum_ref):
    rb = pl.program_id(0)

    @pl.when(rb == 0)
    def _init():
        colsum_ref[...] = jnp.zeros_like(colsum_ref)

    w = w_ref[...].astype(jnp.float32)          # (rows, Np) row panel, W read ONCE
    rows = w_ref.shape[0]
    grow = lax.broadcasted_iota(jnp.int32, w.shape, 0) + rb * rows
    gcol = lax.broadcasted_iota(jnp.int32, w.shape, 1)
    m, _ = _mask_pair(mode, grow, gcol, n, with_valid=True)
    b = jnp.where(m, jax.nn.sigmoid(w), 0.0)    # mask always excludes the diagonal
    colsum_ref[...] += jnp.sum(b, axis=0, keepdims=True)   # (1, Np) lane-dense accumulator
    rowsum_ref[...] = jnp.sum(b, axis=1, keepdims=True)    # (rows, 1), complete per panel


# ---------------------------------------------------------------------------
# Tiled path, pass 2: norm_A[i,j] = d_i^-1/2 * 0.5*(B[i,j]+B[j,i]) * d_j^-1/2
#   (0.5 folded into the pre-scaled row scale; diagonal fixed on ib==jb tiles)
# ---------------------------------------------------------------------------
def _norm_kernel(mode, n, w_ref, wt_ref, invrh_ref, invc_ref, out_ref):
    ib = pl.program_id(0)
    jb = pl.program_id(1)
    tile = w_ref.shape[0]
    s = jax.nn.sigmoid(w_ref[...].astype(jnp.float32))       # W[ib, jb] block
    st = jax.nn.sigmoid(wt_ref[...].astype(jnp.float32)).T   # W[jb, ib]^T block
    if mode == "fully":
        # No mask work at all: off-diag 'fully' mask is 1, diag fixed below,
        # padded rows/cols are sliced off by the wrapper.
        a2 = s + st
    else:
        grow = lax.broadcasted_iota(jnp.int32, s.shape, 0) + ib * tile
        gcol = lax.broadcasted_iota(jnp.int32, s.shape, 1) + jb * tile
        m, mt = _mask_pair(mode, grow, gcol, n, with_valid=False)
        a2 = jnp.where(m, s, 0.0) + jnp.where(mt, st, 0.0)
    # invrh = 0.5 * d_i^-1/2 (symmetrization folded in), invc = d_j^-1/2.
    out_ref[...] = invrh_ref[...] * a2 * invc_ref[...]

    # Diagonal tiles only: A_hat[r,r] = 1  =>  norm_A[r,r] = d_r^-1/2 * d_r^-1/2.
    @pl.when(ib == jb)
    def _fix_diag():
        lr = lax.broadcasted_iota(jnp.int32, out_ref.shape, 0)
        lc = lax.broadcasted_iota(jnp.int32, out_ref.shape, 1)
        out_ref[...] = jnp.where(lr == lc,
                                 2.0 * invrh_ref[...] * invc_ref[...],
                                 out_ref[...])


# ---------------------------------------------------------------------------
# Wrapper
# ---------------------------------------------------------------------------
def _default_fuse_max():
    # v5e/v6e (128 MiB physical VMEM): a fused N<=1024 kernel keeps HBM traffic at
    # ~2*N^2 floats vs ~4*N^2 for the two-pass tiled path.  v7x (64 MiB, 2 TCs):
    # cap at 512 so the tiled, megacore-parallel path is used instead.
    try:
        vmem_bytes = pltpu.get_tpu_info().vmem_capacity_bytes
    except Exception:
        return 512
    return 1024 if vmem_bytes >= 100 * (1 << 20) else 512


def _panel_rows(npad, itemsize):
    budget = 2 * (1 << 20)          # ~2 MiB per panel; Pallas double-buffers it
    for r in (512, 256, 128, 64, 32, 16, 8):
        if npad % r == 0 and r * npad * itemsize <= budget:
            return r
    return 8


def learnable_adjacency_forward(edge_weights, mode="fully", *, tile=None, fuse_max=None):
    """Pallas TPU equivalent of LearnableAdjacency(N, mode).forward()."""
    n = edge_weights.shape[0]
    w = edge_weights                            # native dtype; cast happens in-kernel
    if fuse_max is None:
        fuse_max = _default_fuse_max()

    # ---- fused single-tile path (the module's realistic sizes) -------------
    if tile is None and n <= fuse_max:
        params = (pltpu.CompilerParams(vmem_limit_bytes=96 * (1 << 20))
                  if n > 512 else pltpu.CompilerParams())
        return pl.pallas_call(
            functools.partial(_fused_kernel, mode, n),
            out_shape=jax.ShapeDtypeStruct((n, n), jnp.float32),
            grid=(1,),
            in_specs=[pl.BlockSpec((n, n), lambda i: (0, 0))],
            out_specs=pl.BlockSpec((n, n), lambda i: (0, 0)),
            compiler_params=params,
            cost_estimate=pl.CostEstimate(flops=int(10 * n * n),
                                          transcendentals=int(n * n),
                                          bytes_accessed=int(8 * n * n)),
        )(w)

    # ---- tiled path ---------------------------------------------------------
    if tile is None:
        tile = 512 if (n % 512 == 0 or n >= 2048) else (256 if n % 256 == 0 else 128)
    assert tile % 128 == 0, "tile must be a multiple of 128 (lane width)"

    npad = pl.cdiv(n, tile) * tile
    if npad != n:
        w = jnp.pad(w, ((0, npad - n), (0, npad - n)))   # zero-pad; masked / sliced out
    nb = npad // tile

    # Pass 1: single W stream -> node degrees.
    rows = _panel_rows(npad, jnp.dtype(w.dtype).itemsize)
    colsum, rowsum = pl.pallas_call(
        functools.partial(_degree_kernel, mode, n),
        out_shape=(jax.ShapeDtypeStruct((1, npad), jnp.float32),
                   jax.ShapeDtypeStruct((npad, 1), jnp.float32)),
        grid=(npad // rows,),
        in_specs=[pl.BlockSpec((rows, npad), lambda rb: (rb, 0))],
        out_specs=(pl.BlockSpec((1, npad), lambda rb: (0, 0)),
                   pl.BlockSpec((rows, 1), lambda rb: (rb, 0))),
        compiler_params=pltpu.CompilerParams(dimension_semantics=("arbitrary",)),
        cost_estimate=pl.CostEstimate(flops=int(12 * npad * npad),
                                      transcendentals=int(npad * npad),
                                      bytes_accessed=int(4 * npad * npad)),
    )(w)

    # O(N) epilogue in the wrapper (tiny); degrees >= 1 always -> no inf guard.
    # TODO(synk): fold rsqrt into a pass-1 epilogue once cross-panel rowsums are in-kernel.
    deg = 1.0 + 0.5 * (colsum + rowsum.reshape(1, npad))
    inv = lax.rsqrt(deg)                        # (1, Np) lane-dense column scale
    inv_r_half = (0.5 * inv).reshape(npad, 1)   # row scale with 0.5 folded in

    # Pass 2: outer-scale the symmetrized adjacency.
    # Note: the (tile,1) row-scale block is lane-padded in VMEM (~tile*512 B per
    # buffer) -- accepted consciously; negligible next to the (tile,tile) W streams.
    out = pl.pallas_call(
        functools.partial(_norm_kernel, mode, n),
        out_shape=jax.ShapeDtypeStruct((npad, npad), jnp.float32),
        grid=(nb, nb),
        in_specs=[
            pl.BlockSpec((tile, tile), lambda ib, jb: (ib, jb)),
            pl.BlockSpec((tile, tile), lambda ib, jb: (jb, ib)),
            pl.BlockSpec((tile, 1), lambda ib, jb: (ib, 0)),
            pl.BlockSpec((1, tile), lambda ib, jb: (0, jb)),
        ],
        out_specs=pl.BlockSpec((tile, tile), lambda ib, jb: (ib, jb)),
        compiler_params=pltpu.CompilerParams(
            dimension_semantics=("parallel", "parallel")),
        cost_estimate=pl.CostEstimate(flops=int(6 * npad * npad),
                                      transcendentals=int(2 * npad * npad),
                                      bytes_accessed=int(12 * npad * npad)),
    )(w, w, inv_r_half, inv)

    if npad != n:
        out = out[:n, :n]
    return out


# ---------------------------------------------------------------------------
# Pure-JAX reference (mirrors the PyTorch module exactly) + mask builder
# ---------------------------------------------------------------------------
def build_mask(n, mode="fully"):
    a = jnp.zeros((n, n), jnp.float32)
    if mode == "fully":
        a = jnp.ones((n, n), jnp.float32) - jnp.eye(n, dtype=jnp.float32)
    elif mode == "ring":
        i = jnp.arange(n)
        a = a.at[i, (i + 1) % n].set(1.0)
        a = a.at[i, (i - 1) % n].set(1.0)
    elif mode == "chain":
        i = jnp.arange(n - 1)
        a = a.at[i, i + 1].set(1.0)
    elif mode == "star":
        i = jnp.arange(1, n)
        a = a.at[0, i].set(1.0)
        a = a.at[i, 0].set(1.0)
    return a


def reference_forward(w, mask):
    n = w.shape[0]
    a = jax.nn.sigmoid(w) * mask
    a = (a + a.T) / 2
    a = a * (1.0 - jnp.eye(n, dtype=a.dtype))
    a_hat = a + jnp.eye(n, dtype=a.dtype)
    d = jnp.sum(a_hat, axis=1)
    inv = d ** -0.5
    inv = jnp.where(jnp.isinf(inv), 0.0, inv)
    return inv[:, None] * a_hat * inv[None, :]


if __name__ == "__main__":
    key = jax.random.PRNGKey(0)
    cases = [
        (16, "fully", {}),                  # fused single-tile path (module-typical size)
        (16, "chain", {}),                  # asymmetric mask, fused path
        (16, "ring", {}),                   # fused path
        (16, "star", {}),                   # fused path
        (192, "fully", dict(tile=128)),     # tiled + padding (192 -> 256), mask-free pass 2
        (192, "ring", dict(tile=128)),      # tiled + padding, masked pass 2
        (256, "fully", dict(tile=128)),     # tiled, no padding
    ]
    for n, mode, kw in cases:
        key, sub = jax.random.split(key)
        # nn.Parameter(torch.rand(N, N)) -> uniform [0, 1); deterministic here.
        edge_weights = jax.random.uniform(sub, (n, n), dtype=jnp.float32)

        norm_a = jax.block_until_ready(
            learnable_adjacency_forward(edge_weights, mode, **kw))

        ref = reference_forward(edge_weights, build_mask(n, mode))
        assert norm_a.shape == (n, n)
        err = float(jnp.max(jnp.abs(norm_a - ref)))
        assert jnp.allclose(norm_a, ref, atol=1e-5, rtol=1e-4), (
            f"mismatch for N={n} mode={mode}: max abs err {err:.3e}")

    print("KERNEL_OK")
</pallas_src>

<mosaic_0001>
module attributes {stable_mosaic.version = 11 : i64} {
  func.func @_fused_kernel(%arg0: i32, %arg1: memref<16x16xf32, #tpu.memory_space<vmem>>, %arg2: memref<16x16xf32, #tpu.memory_space<vmem>>) attributes {dimension_semantics = [#tpu.dimension_semantics<arbitrary>], iteration_bounds = array<i64: 1>, scalar_prefetch = 0 : i64, scratch_operands = 0 : i64, tpu.core_type = #tpu.core_type<tc>, window_params = [{pipeline_mode = #tpu.pipeline_mode<synchronous>, transform_indices = @transform_0, window_bounds = array<i64: 16, 16>}, {pipeline_mode = #tpu.pipeline_mode<synchronous>, transform_indices = @transform_1, window_bounds = array<i64: 16, 16>}]} {
    %c0 = arith.constant 0 : index
    %c0_0 = arith.constant 0 : index
    %0 = vector.load %arg1[%c0, %c0_0] : memref<16x16xf32, #tpu.memory_space<vmem>>, vector<16x16xf32>
    %1 = arith.negf %0 : vector<16x16xf32>
    %2 = math.exp %1 : vector<16x16xf32>
    %cst = arith.constant 1.000000e+00 : f32
    %3 = vector.broadcast %cst : f32 to vector<16x16xf32>
    %4 = arith.addf %3, %2 : vector<16x16xf32>
    %5 = arith.divf %3, %4 : vector<16x16xf32>
    %6 = tpu.iota {dimensions = array<i32: 0>} : vector<16x16xi32>
    %7 = tpu.iota {dimensions = array<i32: 1>} : vector<16x16xi32>
    %8 = tpu.transpose %5, [1, 0] : vector<16x16xf32> -> vector<16x16xf32>
    %9 = arith.addf %5, %8 : vector<16x16xf32>
    %cst_1 = arith.constant 5.000000e-01 : f32
    %10 = vector.broadcast %cst_1 : f32 to vector<16x16xf32>
    %11 = arith.mulf %10, %9 : vector<16x16xf32>
    %12 = arith.cmpi eq, %6, %7 : vector<16x16xi32>
    %cst_2 = arith.constant 1.000000e+00 : f32
    %13 = vector.broadcast %cst_2 : f32 to vector<16x16xf32>
    %14 = arith.select %12, %13, %11 : vector<16x16xi1>, vector<16x16xf32>
    %cst_3 = arith.constant dense<0.000000e+00> : vector<16xf32>
    %15 = vector.multi_reduction <add>, %14, %cst_3 [0] : vector<16x16xf32> to vector<16xf32>
    %16 = vector.shape_cast %15 : vector<16xf32> to vector<1x16xf32>
    %17 = math.rsqrt %16 : vector<1x16xf32>
    %18 = tpu.transpose %17, [1, 0] : vector<1x16xf32> -> vector<16x1xf32>
    %19 = vector.broadcast %18 : vector<16x1xf32> to vector<16x16xf32>
    %20 = arith.mulf %19, %14 : vector<16x16xf32>
    %21 = vector.broadcast %17 : vector<1x16xf32> to vector<16x16xf32>
    %22 = arith.mulf %20, %21 : vector<16x16xf32>
    %c0_4 = arith.constant 0 : index
    %c0_5 = arith.constant 0 : index
    %23 = vector.load %arg2[%c0_4, %c0_5] : memref<16x16xf32, #tpu.memory_space<vmem>>, vector<16x16xf32>
    tpu.vector_store %arg2[%c0_4, %c0_5], %22 {strides = array<i32>} : memref<16x16xf32, #tpu.memory_space<vmem>>, vector<16x16xf32>,
    return
  }
  func.func @transform_0(%arg0: i32) -> (i32, i32) {
    %c0_i32 = arith.constant 0 : i32
    %c0_i32_0 = arith.constant 0 : i32
    %c0_i32_1 = arith.constant 0 : i32
    return %c0_i32, %c0_i32_0 : i32, i32
  }
  func.func @transform_1(%arg0: i32) -> (i32, i32) {
    %c0_i32 = arith.constant 0 : i32
    %c0_i32_0 = arith.constant 0 : i32
    %c0_i32_1 = arith.constant 0 : i32
    return %c0_i32, %c0_i32_0 : i32, i32
  }
}

</mosaic_0001>

<llo_original>
// kernel: tpu_custom_call.1
$region0: #{tpu_custom_call.1}
  #allocation0 [shape = 'u32[]', space=smem, size = 0x4, offset = 0x4, fixed_abs, tag = 'smem constant byte address 0x4 - core index']
  #allocation1 [shape = 'u32[144,128]{1,0:T(1,128)}', space=vmem, size = 0x12000, scoped, tag = 'internal scratch']
  %s0 = inlined_call_operand.hbm [shape: f32[16,16], index: 0, kind: input, shape index: {}]
  %s1 = inlined_call_operand.hbm [shape: f32[16,16], index: 1, kind: output, shape index: {}]
  %s2 = sld [smem:[#allocation0]]
  $region18: #{tpu_custom_call.1} parent=0
    _
  %s4 = ssub.s32 1, %s2
  %s5 = scalar_select 0, %s4, %s2
  $region1: #{tpu_custom_call.1} parent=0
    #allocation2 [shape = 'u8[8192]{0}', space=vmem, size = 0x2000, scoped, tag = 'input window, operand 0, single buffered']
    #allocation3 [shape = 's32[1]{0}', space=sflag, size = 0x4, scoped, tag = 'scoped memory for tpu_custom_call.1']
    #allocation4 [shape = 's32[1]{0}', space=sflag, size = 0x4, scoped, tag = 'scoped memory for tpu_custom_call.1']
    #allocation5 [shape = 'u8[8192]{0}', space=vmem, size = 0x2000, scoped, tag = 'output window, operand 0, single buffered']
    %6 = vsyncpa [#allocation3], 0
    %7 = vsyncpa [#allocation4], 0
    // Predicated region
    $region2: #{tpu_custom_call.1} parent=1 // pred_check
      _
    $region3: #{tpu_custom_call.1} parent=1 // pred_check_branch
      %9 = sbr.rel (0) target = $region5
    $region4: #{tpu_custom_call.1} parent=1 // pred_region
      %s11 = ssub.s32 256, 256
      %12 = vsyncadd [#allocation3], %s11
      %s13 = sshll.u32 [#allocation2], 4
      %s14 = int_to_ptr.vmem [resolvable:$true] %s13
      %19 = dma.hbm_to_vmem [thread:$0]  %s0, 256, %s14, [#allocation3], 128, 128, 8
    $region5: #{tpu_custom_call.1} parent=1 // pred_fallthru
      _
    // Predicated region
    $region6: #{tpu_custom_call.1} parent=1 // pred_check
      _
    $region7: #{tpu_custom_call.1} parent=1 // pred_check_branch
      %21 = sbr.rel (0) target = $region9
    $region8: #{tpu_custom_call.1} parent=1 // pred_region
      %22 = dma.done [#allocation3], 256
    $region9: #{tpu_custom_call.1} parent=1 // pred_fallthru
      _
    %v23 = vld [vmem:[#allocation2] sm:$0xff]
    %v24 = vld [vmem:[#allocation2 + $0x8] sm:$0xff]
    %v25 = vxor.u32 %v23, 2147483648
    %v26 = vxor.u32 %v24, 2147483648
    %v27 = vmul.f32 %v25, 1.442695
    %v28 = vpow.pop %v27
    %v29 = vmul.f32 %v26, 1.442695
    %v30 = vpow.pop %v29
    %v31 = vadd.f32 %v28, 1.0
    %v32 = vadd.f32 %v30, 1.0
    %v33 = vrcp.pop %v31
    %v34 = vmul.f32 1.0, %v33
    %v35 = vrcp.pop %v32
    %v36 = vmul.f32 1.0, %v35
    %v37 = vlaneseq
    %v38 = vshrl.u32 %v37, 7
    %v39 = vadd.s32 %v38, 8
    %v40 = vlaneseq
    %v41 = vand.u32 %v40, 127
    %42 = vxpose.xlu0.b32.start [1/16] %v34, 128
    %43 = vxpose.xlu0.b32.cont [2/16] %v36, 128
    %44 = vxpose.xlu0.b32.cont [3/16] 0.0, 128
    %45 = vxpose.xlu0.b32.cont [4/16] 0.0, 128
    %46 = vxpose.xlu0.b32.cont [5/16] 0.0, 128
    %47 = vxpose.xlu0.b32.cont [6/16] 0.0, 128
    %48 = vxpose.xlu0.b32.cont [7/16] 0.0, 128
    %49 = vxpose.xlu0.b32.cont [8/16] 0.0, 128
    %50 = vxpose.xlu0.b32.cont [9/16] 0.0, 128
    %51 = vxpose.xlu0.b32.cont [10/16] 0.0, 128
    %52 = vxpose.xlu0.b32.cont [11/16] 0.0, 128
    %53 = vxpose.xlu0.b32.cont [12/16] 0.0, 128
    %54 = vxpose.xlu0.b32.cont [13/16] 0.0, 128
    %55 = vxpose.xlu0.b32.cont [14/16] 0.0, 128
    %56 = vxpose.xlu0.b32.cont [15/16] 0.0, 128
    %57 = vxpose.xlu0.b32.end [16/16] 0.0, 128
    %v58 = vpop.trf.xlu0
    %v59 = vpop.trf.xlu0
    %v60 = vpop.trf.xlu0
    %v61 = vpop.trf.xlu0
    %v62 = vpop.trf.xlu0
    %v63 = vpop.trf.xlu0
    %v64 = vpop.trf.xlu0
    %v65 = vpop.trf.xlu0
    %v66 = vpop.trf.xlu0
    %v67 = vpop.trf.xlu0
    %v68 = vpop.trf.xlu0
    %v69 = vpop.trf.xlu0
    %v70 = vpop.trf.xlu0
    %v71 = vpop.trf.xlu0
    %v72 = vpop.trf.xlu0
    %v73 = vpop.trf.xlu0
    %v74 = vadd.f32 %v34, %v58
    %v75 = vadd.f32 %v36, %v59
    %v76 = vmul.f32 %v74, 0.5
    %v77 = vmul.f32 %v75, 0.5
    %vm78 = vcmp.eq.s32.totalorder %v38, %v41
    %vm79 = vcmp.eq.s32.totalorder %v39, %v41
    %v80 = vsel %vm78, 1.0, %v76
    %v81 = vsel %vm79, 1.0, %v77
    %vm82 = vcmask 130048
    %v83 = vsel %vm82, %v80, 0.0
    %v84 = vsel %vm82, %v81, 0.0
    %v85 = vadd.f32 %v83, %v84
    %v86 = vrot.slane %v85, 4
    %v87 = vadd.f32 %v85, %v86
    %v88 = vrot.slane %v87, 2
    %v89 = vadd.f32 %v87, %v88
    %v90 = vrot.slane %v89, 1
    %v91 = vadd.f32 %v89, %v90
    %v92 = vrsqrt.pop %v91
    %93 = vxpose.xlu0.b32.start [1/16] %v92, 128
    %94 = vxpose.xlu0.b32.cont [2/16] 0.0, 128
    %95 = vxpose.xlu0.b32.cont [3/16] 0.0, 128
    %96 = vxpose.xlu0.b32.cont [4/16] 0.0, 128
    %97 = vxpose.xlu0.b32.cont [5/16] 0.0, 128
    %98 = vxpose.xlu0.b32.cont [6/16] 0.0, 128
    %99 = vxpose.xlu0.b32.cont [7/16] 0.0, 128
    %100 = vxpose.xlu0.b32.cont [8/16] 0.0, 128
    %101 = vxpose.xlu0.b32.cont [9/16] 0.0, 128
    %102 = vxpose.xlu0.b32.cont [10/16] 0.0, 128
    %103 = vxpose.xlu0.b32.cont [11/16] 0.0, 128
    %104 = vxpose.xlu0.b32.cont [12/16] 0.0, 128
    %105 = vxpose.xlu0.b32.cont [13/16] 0.0, 128
    %106 = vxpose.xlu0.b32.cont [14/16] 0.0, 128
    %107 = vxpose.xlu0.b32.cont [15/16] 0.0, 128
    %108 = vxpose.xlu0.b32.end [16/16] 0.0, 128
    %v109 = vpop.trf.xlu0
    %v110 = vpop.trf.xlu0
    %v111 = vpop.trf.xlu0
    %v112 = vpop.trf.xlu0
    %v113 = vpop.trf.xlu0
    %v114 = vpop.trf.xlu0
    %v115 = vpop.trf.xlu0
    %v116 = vpop.trf.xlu0
    %v117 = vpop.trf.xlu0
    %v118 = vpop.trf.xlu0
    %v119 = vpop.trf.xlu0
    %v120 = vpop.trf.xlu0
    %v121 = vpop.trf.xlu0
    %v122 = vpop.trf.xlu0
    %v123 = vpop.trf.xlu0
    %v124 = vpop.trf.xlu0
    %126 = vset.pattern.permute.xlu0 0
    %127 = vperm.xlu0 %126, %v109
    %v128 = vpop.permute.xlu0 %127
    %131 = vset.pattern.permute.xlu0 0
    %132 = vperm.xlu0 %131, %v110
    %v133 = vpop.permute.xlu0 %132
    %v135 = vmul.f32 %v128, %v80
    %v136 = vmul.f32 %v133, %v81
    %v137 = vmul.f32 %v135, %v92
    %v138 = vmul.f32 %v136, %v92
    %139 = vst.msk [vmem:[#allocation5] sm:$0xff] %vm82, %v137
    %140 = vst.msk [vmem:[#allocation5 + $0x8] sm:$0xff] %vm82, %v138
    // Predicated region
    $region10: #{tpu_custom_call.1} parent=1 // pred_check
      _
    $region11: #{tpu_custom_call.1} parent=1 // pred_check_branch
      %142 = sbr.rel (0) target = $region13
    $region12: #{tpu_custom_call.1} parent=1 // pred_region
      %s144 = ssub.s32 256, 256
      %145 = vsyncadd [#allocation4], %s144
      %s146 = sshll.u32 [#allocation5], 4
      %s147 = int_to_ptr.vmem [resolvable:$true] %s146
      %152 = dma.vmem_to_hbm [thread:$0]  %s147, 256, %s1, [#allocation4], 128, 128, 8
    $region13: #{tpu_custom_call.1} parent=1 // pred_fallthru
      _
    // Predicated region
    $region14: #{tpu_custom_call.1} parent=1 // pred_check
      _
    $region15: #{tpu_custom_call.1} parent=1 // pred_check_branch
      %154 = sbr.rel (0) target = $region17
    $region16: #{tpu_custom_call.1} parent=1 // pred_region
      %155 = dma.done [#allocation4], 256
    $region17: #{tpu_custom_call.1} parent=1 // pred_fallthru
      _
    %156 = vsyncpa [#allocation3], 1
    %157 = vsyncpa [#allocation4], 1

</llo_original>
